<compile_context>
chip_gen: v5e
topology: v5e:2x2
jax: 0.10.0
libtpu: 0.0.40
codegen_flags: <defaults>
</compile_context>

<pallas_src>
import functools

import jax
import jax.numpy as jnp
from jax.experimental import pallas as pl
from jax.experimental.pallas import tpu as pltpu


def channel_shuffle_kernel(x_ref, o_ref, *, groups):
    # Block: (1, C, HW).  C -> sublanes, HW -> lanes (lane-dense).
    _, C, _ = x_ref.shape
    cg = C // groups
    # PyTorch ChannelShuffle: out channel co = cpg * groups + g comes from
    # input channel ci = g * cg + cpg.  Statically unrolled row copies — the
    # permutation lives entirely on the (cheap) sublane axis; every copy is a
    # full-lane row, no masks along lanes, no relayout buffers.
    for co in range(C):
        cpg, g = divmod(co, groups)
        ci = g * cg + cpg
        o_ref[0, co, :] = x_ref[0, ci, :]


def channel_shuffle(x, *, groups):
    N, C, H, W = x.shape
    assert C % groups == 0, f"channels ({C}) must be divisible by groups ({groups})"
    HW = H * W  # lane-dense last dim (ideally a multiple of 128; 256 here)
    xf = x.reshape(N, C, HW)
    out = pl.pallas_call(
        functools.partial(channel_shuffle_kernel, groups=groups),
        out_shape=jax.ShapeDtypeStruct((N, C, HW), x.dtype),
        grid=(N,),
        in_specs=[pl.BlockSpec((1, C, HW), lambda n: (n, 0, 0))],
        out_specs=pl.BlockSpec((1, C, HW), lambda n: (n, 0, 0)),
        compiler_params=pltpu.CompilerParams(dimension_semantics=("parallel",)),
    )(xf)
    return out.reshape(N, C, H, W)


def ref_channel_shuffle(x, groups):
    # Pure-JAX reference mirroring the PyTorch forward exactly.
    N, C, H, W = x.shape
    y = x.reshape(N, groups, C // groups, H, W)
    y = jnp.transpose(y, (0, 2, 1, 3, 4))
    return y.reshape(N, C, H, W)


if __name__ == "__main__":
    groups = 3
    N, C, H, W = 2, 6, 16, 16   # C divisible by groups; H*W = 256 -> lane-dense

    key = jax.random.PRNGKey(0)
    x = jax.random.normal(key, (N, C, H, W), dtype=jnp.float32)

    shuffle = jax.jit(functools.partial(channel_shuffle, groups=groups))
    out = jax.block_until_ready(shuffle(x))

    ref = jax.block_until_ready(ref_channel_shuffle(x, groups))
    assert out.shape == x.shape and out.dtype == x.dtype
    # Pure data movement -> results must match bit-exactly.
    assert jnp.array_equal(out, ref), float(jnp.max(jnp.abs(out - ref)))

    print("KERNEL_OK")
</pallas_src>

<mosaic_0001>
module attributes {stable_mosaic.version = 11 : i64} {
  func.func @channel_shuffle_kernel(%arg0: i32, %arg1: memref<1x6x256xf32, #tpu.memory_space<vmem>>, %arg2: memref<1x6x256xf32, #tpu.memory_space<vmem>>) attributes {dimension_semantics = [#tpu.dimension_semantics<parallel>], iteration_bounds = array<i64: 2>, scalar_prefetch = 0 : i64, scratch_operands = 0 : i64, tpu.core_type = #tpu.core_type<tc>, window_params = [{transform_indices = @transform_0, window_bounds = array<i64: 1, 6, 256>}, {transform_indices = @transform_1, window_bounds = array<i64: 1, 6, 256>}]} {
    %c0 = arith.constant 0 : index
    %c0_0 = arith.constant 0 : index
    %c0_1 = arith.constant 0 : index
    %0 = vector.load %arg1[%c0, %c0_0, %c0_1] : memref<1x6x256xf32, #tpu.memory_space<vmem>>, vector<1x1x256xf32>
    %1 = vector.shape_cast %0 : vector<1x1x256xf32> to vector<256xf32>
    %c0_2 = arith.constant 0 : index
    %c0_3 = arith.constant 0 : index
    %c0_4 = arith.constant 0 : index
    %2 = vector.load %arg2[%c0_2, %c0_3, %c0_4] : memref<1x6x256xf32, #tpu.memory_space<vmem>>, vector<1x1x256xf32>
    %3 = vector.shape_cast %2 : vector<1x1x256xf32> to vector<256xf32>
    %4 = vector.shape_cast %1 : vector<256xf32> to vector<1x1x256xf32>
    tpu.vector_store %arg2[%c0_2, %c0_3, %c0_4], %4 {strides = array<i32>} : memref<1x6x256xf32, #tpu.memory_space<vmem>>, vector<1x1x256xf32>,
    %c0_5 = arith.constant 0 : index
    %c2 = arith.constant 2 : index
    %c0_6 = arith.constant 0 : index
    %5 = vector.load %arg1[%c0_5, %c2, %c0_6] : memref<1x6x256xf32, #tpu.memory_space<vmem>>, vector<1x1x256xf32>
    %6 = vector.shape_cast %5 : vector<1x1x256xf32> to vector<256xf32>
    %c0_7 = arith.constant 0 : index
    %c1 = arith.constant 1 : index
    %c0_8 = arith.constant 0 : index
    %7 = vector.load %arg2[%c0_7, %c1, %c0_8] : memref<1x6x256xf32, #tpu.memory_space<vmem>>, vector<1x1x256xf32>
    %8 = vector.shape_cast %7 : vector<1x1x256xf32> to vector<256xf32>
    %9 = vector.shape_cast %6 : vector<256xf32> to vector<1x1x256xf32>
    tpu.vector_store %arg2[%c0_7, %c1, %c0_8], %9 {strides = array<i32>} : memref<1x6x256xf32, #tpu.memory_space<vmem>>, vector<1x1x256xf32>,
    %c0_9 = arith.constant 0 : index
    %c4 = arith.constant 4 : index
    %c0_10 = arith.constant 0 : index
    %10 = vector.load %arg1[%c0_9, %c4, %c0_10] : memref<1x6x256xf32, #tpu.memory_space<vmem>>, vector<1x1x256xf32>
    %11 = vector.shape_cast %10 : vector<1x1x256xf32> to vector<256xf32>
    %c0_11 = arith.constant 0 : index
    %c2_12 = arith.constant 2 : index
    %c0_13 = arith.constant 0 : index
    %12 = vector.load %arg2[%c0_11, %c2_12, %c0_13] : memref<1x6x256xf32, #tpu.memory_space<vmem>>, vector<1x1x256xf32>
    %13 = vector.shape_cast %12 : vector<1x1x256xf32> to vector<256xf32>
    %14 = vector.shape_cast %11 : vector<256xf32> to vector<1x1x256xf32>
    tpu.vector_store %arg2[%c0_11, %c2_12, %c0_13], %14 {strides = array<i32>} : memref<1x6x256xf32, #tpu.memory_space<vmem>>, vector<1x1x256xf32>,
    %c0_14 = arith.constant 0 : index
    %c1_15 = arith.constant 1 : index
    %c0_16 = arith.constant 0 : index
    %15 = vector.load %arg1[%c0_14, %c1_15, %c0_16] : memref<1x6x256xf32, #tpu.memory_space<vmem>>, vector<1x1x256xf32>
    %16 = vector.shape_cast %15 : vector<1x1x256xf32> to vector<256xf32>
    %c0_17 = arith.constant 0 : index
    %c3 = arith.constant 3 : index
    %c0_18 = arith.constant 0 : index
    %17 = vector.load %arg2[%c0_17, %c3, %c0_18] : memref<1x6x256xf32, #tpu.memory_space<vmem>>, vector<1x1x256xf32>
    %18 = vector.shape_cast %17 : vector<1x1x256xf32> to vector<256xf32>
    %19 = vector.shape_cast %16 : vector<256xf32> to vector<1x1x256xf32>
    tpu.vector_store %arg2[%c0_17, %c3, %c0_18], %19 {strides = array<i32>} : memref<1x6x256xf32, #tpu.memory_space<vmem>>, vector<1x1x256xf32>,
    %c0_19 = arith.constant 0 : index
    %c3_20 = arith.constant 3 : index
    %c0_21 = arith.constant 0 : index
    %20 = vector.load %arg1[%c0_19, %c3_20, %c0_21] : memref<1x6x256xf32, #tpu.memory_space<vmem>>, vector<1x1x256xf32>
    %21 = vector.shape_cast %20 : vector<1x1x256xf32> to vector<256xf32>
    %c0_22 = arith.constant 0 : index
    %c4_23 = arith.constant 4 : index
    %c0_24 = arith.constant 0 : index
    %22 = vector.load %arg2[%c0_22, %c4_23, %c0_24] : memref<1x6x256xf32, #tpu.memory_space<vmem>>, vector<1x1x256xf32>
    %23 = vector.shape_cast %22 : vector<1x1x256xf32> to vector<256xf32>
    %24 = vector.shape_cast %21 : vector<256xf32> to vector<1x1x256xf32>
    tpu.vector_store %arg2[%c0_22, %c4_23, %c0_24], %24 {strides = array<i32>} : memref<1x6x256xf32, #tpu.memory_space<vmem>>, vector<1x1x256xf32>,
    %c0_25 = arith.constant 0 : index
    %c5 = arith.constant 5 : index
    %c0_26 = arith.constant 0 : index
    %25 = vector.load %arg1[%c0_25, %c5, %c0_26] : memref<1x6x256xf32, #tpu.memory_space<vmem>>, vector<1x1x256xf32>
    %26 = vector.shape_cast %25 : vector<1x1x256xf32> to vector<256xf32>
    %c0_27 = arith.constant 0 : index
    %c5_28 = arith.constant 5 : index
    %c0_29 = arith.constant 0 : index
    %27 = vector.load %arg2[%c0_27, %c5_28, %c0_29] : memref<1x6x256xf32, #tpu.memory_space<vmem>>, vector<1x1x256xf32>
    %28 = vector.shape_cast %27 : vector<1x1x256xf32> to vector<256xf32>
    %29 = vector.shape_cast %26 : vector<256xf32> to vector<1x1x256xf32>
    tpu.vector_store %arg2[%c0_27, %c5_28, %c0_29], %29 {strides = array<i32>} : memref<1x6x256xf32, #tpu.memory_space<vmem>>, vector<1x1x256xf32>,
    return
  }
  func.func @transform_0(%arg0: i32) -> (i32, i32, i32) {
    %c0_i32 = arith.constant 0 : i32
    %c0_i32_0 = arith.constant 0 : i32
    %c0_i32_1 = arith.constant 0 : i32
    return %arg0, %c0_i32, %c0_i32_0 : i32, i32, i32
  }
  func.func @transform_1(%arg0: i32) -> (i32, i32, i32) {
    %c0_i32 = arith.constant 0 : i32
    %c0_i32_0 = arith.constant 0 : i32
    %c0_i32_1 = arith.constant 0 : i32
    return %arg0, %c0_i32, %c0_i32_0 : i32, i32, i32
  }
}

</mosaic_0001>

<llo_original>
// kernel: channel_shuffle.1
$region0: #{channel_shuffle.1}
  #allocation0 [shape = 'u32[]', space=smem, size = 0x4, offset = 0x4, fixed_abs, tag = 'smem constant byte address 0x4 - core index']
  #allocation1 [shape = 'u32[72,128]{1,0:T(1,128)}', space=vmem, size = 0x9000, scoped, tag = 'internal scratch']
  %s0 = inlined_call_operand.vmem [shape: f32[2,6,256], index: 0, kind: input, shape index: {}]
  %s1 = inlined_call_operand.vmem [shape: f32[2,6,256], index: 1, kind: output, shape index: {}]
  %s2 = sld [smem:[#allocation0]]
  $region37: #{channel_shuffle.1} parent=0
    _
  %s4 = ssub.s32 1, %s2
  %s5 = scalar_select 0, %s4, %s2
  loop: start=0, step=1, limit=4
  $region2: #{channel_shuffle.1} parent=0 // loop_pre_header
    _
  $region3: #{channel_shuffle.1} parent=0 // loop_header
    %s7 = sphi 0, %s11
    %p8 = scmp.ge.s32.totalorder %s7, 4
    %s17 = sphi 0, %s19
    %s20 = sphi 0, %s17
    %s21 = sphi 0, %s20
    %s37 = sphi 0, %s21
    %s43 = sphi 0, %s45
    %s46 = sphi 0, %s43
    %s47 = sphi 0, %s46
    %s63 = sphi 0, %s47
  $region4: #{channel_shuffle.1} parent=0 // loop_header_branch
    %10 = sbr.rel (%p8) target = $region8
  $region5: #{channel_shuffle.1} parent=0 // loop_body
    %s12 = ssub.s32 %s7, 1
    %s13 = ssub.s32 %s7, 2
    %s14 = sadd.s32 %s7, 1
    %s15 = ssub.s32 %s7, %s14
    %p16 = scmp.eq.s32.totalorder %s15, 0
    %s18 = sadd.s32 %s17, 1
    %s19 = scalar_select %p16, %s17, %s18
    %p22 = pneg %p16
    %p23 = scmp.eq.s32.totalorder %s7, 1
    %p24 = por %p22, %p23
    %p25 = scmp.ne.s32.totalorder %s17, %s20
    %p26 = scmp.eq.s32.totalorder %s7, 0
    %p27 = por %p25, %p26
    %p28 = scmp.ne.s32.totalorder %s17, %s20
    %p29 = scmp.eq.s32.totalorder %s12, 1
    %p30 = por %p28, %p29
    %p31 = scmp.ne.s32.totalorder %s20, %s21
    %p32 = scmp.eq.s32.totalorder %s12, 0
    %p33 = por %p31, %p32
    %p34 = scmp.ne.s32.totalorder %s20, %s21
    %p35 = scmp.eq.s32.totalorder %s13, 1
    %p36 = por %p34, %p35
    %p38 = scmp.ne.s32.totalorder %s21, %s37
    %p39 = scmp.eq.s32.totalorder %s13, 0
    %p40 = por %p38, %p39
    %s41 = ssub.s32 %s7, %s14
    %p42 = scmp.eq.s32.totalorder %s41, 0
    %s44 = sadd.s32 %s43, 1
    %s45 = scalar_select %p42, %s43, %s44
    %p48 = pneg %p42
    %p49 = scmp.eq.s32.totalorder %s7, 1
    %p50 = por %p48, %p49
    %p51 = scmp.ne.s32.totalorder %s43, %s46
    %p52 = scmp.eq.s32.totalorder %s7, 0
    %p53 = por %p51, %p52
    %p54 = scmp.ne.s32.totalorder %s43, %s46
    %p55 = scmp.eq.s32.totalorder %s12, 1
    %p56 = por %p54, %p55
    %p57 = scmp.ne.s32.totalorder %s46, %s47
    %p58 = scmp.eq.s32.totalorder %s12, 0
    %p59 = por %p57, %p58
    %p60 = scmp.ne.s32.totalorder %s46, %s47
    %p61 = scmp.eq.s32.totalorder %s13, 1
    %p62 = por %p60, %p61
    %p64 = scmp.ne.s32.totalorder %s47, %s63
    %p65 = scmp.eq.s32.totalorder %s13, 0
    %p66 = por %p64, %p65
    %p67 = scmp.le.s32.totalorder 1, %s7
    %p68 = scmp.lt.s32.totalorder %s7, 3
    %p69 = pnand %p67, %p68
    %p70 = pneg %p69
    // Predicated region
    $region9: #{channel_shuffle.1} parent=5 // pred_check
      _
    $region10: #{channel_shuffle.1} parent=5 // pred_check_branch
      %72 = sbr.rel (%p69) target = $region12
    $region11: #{channel_shuffle.1} parent=5 // pred_region
      %s73 = ssub.s32 %s7, 1
    $region12: #{channel_shuffle.1} parent=5 // pred_fallthru
      _
    %p74 = scmp.lt.s32.totalorder %s7, 2
    // Predicated region
    $region13: #{channel_shuffle.1} parent=5 // pred_check
      %p75 = pneg %p74
    $region14: #{channel_shuffle.1} parent=5 // pred_check_branch
      %77 = sbr.rel (%p75) target = $region16
    $region15: #{channel_shuffle.1} parent=5 // pred_region
      // Predicated region
      $region17: #{channel_shuffle.1} parent=15 // pred_check
        %p78 = pneg %p27
      $region18: #{channel_shuffle.1} parent=15 // pred_check_branch
        %80 = sbr.rel (%p78) target = $region20
      $region19: #{channel_shuffle.1} parent=15 // pred_region
        %p81 = scmp.lt.s32.totalorder %s7, 1
        %s82 = scalar_select %p81, %s7, 1
        %s83 = smul.addr %s82, 2
        %s84 = smul.addr %s83, 8
        %s85 = scalar_lea.vmem %s0, %s84
      $region20: #{channel_shuffle.1} parent=15 // pred_fallthru
        _
    $region16: #{channel_shuffle.1} parent=5 // pred_fallthru
      _
    %p86 = scmp.le.s32.totalorder 1, %s7
    %p87 = scmp.lt.s32.totalorder %s7, 3
    %p88 = pnand %p86, %p87
    %p89 = pneg %p88
    // Predicated region
    $region21: #{channel_shuffle.1} parent=5 // pred_check
      _
    $region22: #{channel_shuffle.1} parent=5 // pred_check_branch
      %91 = sbr.rel (%p88) target = $region24
    $region23: #{channel_shuffle.1} parent=5 // pred_region
      %s92 = ssub.s32 %s7, 1
      %p93 = scmp.lt.s32.totalorder %s12, 1
      %s94 = scalar_select %p93, %s12, 1
      %s95 = smul.addr %s94, 2
      %s96 = smul.addr %s95, 8
      %s97 = scalar_lea.vmem %s0, %s96
      %p98 = pneg %p33
      %p99 = pneg %p30
      %p100 = pneg %p59
      %p101 = pneg %p56
      %p102 = scmp.lt.s32.totalorder %s12, 1
      %s103 = scalar_select %p102, %s12, 1
      %s104 = smul.addr %s103, 2
      %s105 = smul.addr %s104, 8
      %s106 = scalar_lea.vmem %s1, %s105
      %p107 = scmp.lt.s32.totalorder %s12, 1
      %s108 = scalar_select %p107, %s12, 1
      %s109 = smul.addr %s108, 2
      %s110 = smul.addr %s109, 8
      %s111 = scalar_lea.vmem %s0, %s110
      %p112 = scmp.lt.s32.totalorder %s12, 1
      %s113 = scalar_select %p112, %s12, 1
      %s114 = smul.addr %s113, 2
      %s115 = smul.addr %s114, 8
      %s116 = scalar_lea.vmem %s1, %s115
      %v117 = vld [vmem:[%s111] ss:$8 sm:$0x3]
      %v118 = vlaneseq
      %vm119 = vcmp.ge.s32.totalorder %v118, 0
      %vm120 = vcmp.lt.s32.totalorder %v118, 256
      %vm121 = vmand %vm119, %vm120
      %122 = vst.msk [vmem:[%s116] ss:$8 sm:$0x3] %vm121, %v117
      %123 = vst.msk [vmem:[%s116] ss:$8 sm:$0x0] %vm121, %v117
      %s124 = scalar_lea.vmem %s111, 2
      %v125 = vld [vmem:[%s124] ss:$8 sm:$0x3]
      %s126 = scalar_lea.vmem %s116, 1
      %127 = vst.msk [vmem:[%s126] ss:$8 sm:$0x3] %vm121, %v125
      %128 = vst.msk [vmem:[%s126] ss:$8 sm:$0x0] %vm121, %v125
      %s129 = scalar_lea.vmem %s111, 4
      %v130 = vld [vmem:[%s129] ss:$8 sm:$0x3]
      %s131 = scalar_lea.vmem %s116, 2
      %132 = vst.msk [vmem:[%s131] ss:$8 sm:$0x3] %vm121, %v130
      %133 = vst.msk [vmem:[%s131] ss:$8 sm:$0x0] %vm121, %v130
      %s134 = scalar_lea.vmem %s111, 1
      %v135 = vld [vmem:[%s134] ss:$8 sm:$0x3]
      %s136 = scalar_lea.vmem %s116, 3
      %137 = vst.msk [vmem:[%s136] ss:$8 sm:$0x3] %vm121, %v135
      %138 = vst.msk [vmem:[%s136] ss:$8 sm:$0x0] %vm121, %v135
      %s139 = scalar_lea.vmem %s111, 3
      %v140 = vld [vmem:[%s139] ss:$8 sm:$0x3]
      %s141 = scalar_lea.vmem %s116, 4
      %142 = vst.msk [vmem:[%s141] ss:$8 sm:$0x3] %vm121, %v140
      %143 = vst.msk [vmem:[%s141] ss:$8 sm:$0x0] %vm121, %v140
      %s144 = scalar_lea.vmem %s111, 5
      %v145 = vld [vmem:[%s144] ss:$8 sm:$0x3]
      %s146 = scalar_lea.vmem %s116, 5
      %147 = vst.msk [vmem:[%s146] ss:$8 sm:$0x3] %vm121, %v145
      %148 = vst.msk [vmem:[%s146] ss:$8 sm:$0x0] %vm121, %v145
      %p149 = scmp.lt.s32.totalorder %s12, 1
      %s150 = scalar_select %p149, %s12, 1
      %s151 = smul.addr %s150, 2
      %s152 = smul.addr %s151, 8
      %s153 = scalar_lea.vmem %s1, %s152
      // Predicated region
      $region25: #{channel_shuffle.1} parent=23 // pred_check
        %p154 = pneg %p56
      $region26: #{channel_shuffle.1} parent=23 // pred_check_branch
        %156 = sbr.rel (%p154) target = $region28
      $region27: #{channel_shuffle.1} parent=23 // pred_region
        _
      $region28: #{channel_shuffle.1} parent=23 // pred_fallthru
        _
    $region24: #{channel_shuffle.1} parent=5 // pred_fallthru
      _
    %p157 = scmp.le.s32.totalorder 2, %s7
    // Predicated region
    $region29: #{channel_shuffle.1} parent=5 // pred_check
      %p158 = pneg %p157
    $region30: #{channel_shuffle.1} parent=5 // pred_check_branch
      %160 = sbr.rel (%p158) target = $region32
    $region31: #{channel_shuffle.1} parent=5 // pred_region
      %s161 = ssub.s32 %s7, 2
      // Predicated region
      $region33: #{channel_shuffle.1} parent=31 // pred_check
        %p162 = pneg %p62
      $region34: #{channel_shuffle.1} parent=31 // pred_check_branch
        %164 = sbr.rel (%p162) target = $region36
      $region35: #{channel_shuffle.1} parent=31 // pred_region
        %p165 = scmp.lt.s32.totalorder %s13, 1
        %s166 = scalar_select %p165, %s13, 1
        %s167 = smul.addr %s166, 2
        %s168 = smul.addr %s167, 8
        %s169 = scalar_lea.vmem %s1, %s168
      $region36: #{channel_shuffle.1} parent=31 // pred_fallthru
        _
    $region32: #{channel_shuffle.1} parent=5 // pred_fallthru
      _
  $region6: #{channel_shuffle.1} parent=0 // loop_footer
    %s11 = sadd.s32 1, %s7
  $region7: #{channel_shuffle.1} parent=0 // loop_footer_branch
    %6 = sbr.rel target = $region3
  $region8: #{channel_shuffle.1} parent=0 // loop_exit
    _

</llo_original>
